<compile_context>
chip_gen: v5e
topology: v5e:2x2
jax: 0.10.0
libtpu: 0.0.40
codegen_flags: <defaults>
</compile_context>

<pallas_src>
import functools

import jax
import jax.numpy as jnp
from jax.experimental import pallas as pl
from jax.experimental.pallas import tpu as pltpu

_COLS = 512        # lane-dense last dim: 4 * 128 lanes
_COLS_LOG2 = 9     # 512 == 1 << 9


def _dropout_kernel(seed_ref, x_ref, o_ref, *, p, block_rows):
    # Integer keep-threshold computed at trace time: P(h >= threshold) = 1 - p.
    threshold = min(max(int(round(p * 4294967296.0)), 0), 4294967295)

    shape = x_ref.shape  # (block_rows, _COLS)

    # Global element coordinates (tile offset folded in -> independent bits
    # per tile and per grid step).
    row_off = (pl.program_id(0) * block_rows).astype(jnp.uint32)
    row = jax.lax.broadcasted_iota(jnp.int32, shape, 0).astype(jnp.uint32) + row_off
    col = jax.lax.broadcasted_iota(jnp.int32, shape, 1).astype(jnp.uint32)

    # Single global linear counter per element: (row << 9) | col.
    idx = (row << jnp.uint32(_COLS_LOG2)) | col

    # Seed mixing is a SCALAR multiply (one op), broadcast into the xor.
    seed = seed_ref[0].astype(jnp.uint32)
    h = idx ^ (seed * jnp.uint32(0x9E3779B9))

    # lowbias32 finalizer: good avalanche on sequential counters.
    h = h ^ (h >> 16)
    h = h * jnp.uint32(0x7FEB352D)
    h = h ^ (h >> 15)
    h = h * jnp.uint32(0x846CA68B)
    h = h ^ (h >> 16)

    keep = h >= jnp.uint32(threshold)

    # Stay in the native dtype (bf16 is native on v6e/v7x VPUs; f32 everywhere).
    scale = jnp.asarray(1.0 / (1.0 - p), dtype=x_ref.dtype)
    zero = jnp.zeros((), dtype=x_ref.dtype)
    o_ref[...] = jnp.where(keep, x_ref[...] * scale, zero)


def dropout_always_on(x, seed, p, inplace=False):
    """Training-mode dropout applied unconditionally (the DropoutEvalOverrider)."""
    p = float(p)
    if p <= 0.0:
        return x
    if p >= 1.0:
        return jnp.zeros_like(x)

    orig_shape = x.shape
    orig_dtype = x.dtype
    total = int(x.size)
    if total == 0:
        return x

    itemsize = jnp.dtype(orig_dtype).itemsize

    # Target ~2 MiB per tile (1024 rows of 512 f32 lanes).  With input+output
    # double-buffered that is ~8 MiB of VMEM — comfortably under the 32 MiB
    # scoped limit on every chip generation, and at the measured knee of the
    # HBM-roofline curve (512/1024-wide tiles ~85-86%).
    target_rows = max(8, (2 * 1024 * 1024) // (_COLS * itemsize))
    target_rows = (target_rows // 8) * 8

    rows_needed = -(-total // _COLS)
    tm = min(target_rows, ((rows_needed + 7) // 8) * 8)
    padded_rows = ((rows_needed + tm - 1) // tm) * tm
    padded_total = padded_rows * _COLS

    x_flat = x.reshape(-1)
    if padded_total > total:
        x_flat = jnp.pad(x_flat, (0, padded_total - total))
    x2 = x_flat.reshape(padded_rows, _COLS)

    grid = (padded_rows // tm,)
    seed_arr = jnp.asarray([seed], dtype=jnp.int32)

    kernel = functools.partial(_dropout_kernel, p=p, block_rows=tm)

    cost = pl.CostEstimate(
        flops=10 * padded_total,          # handful of VPU int/select ops per element
        transcendentals=0,
        bytes_accessed=2 * padded_total * itemsize,
    )

    out2 = pl.pallas_call(
        kernel,
        out_shape=jax.ShapeDtypeStruct((padded_rows, _COLS), orig_dtype),
        grid_spec=pltpu.PrefetchScalarGridSpec(
            num_scalar_prefetch=1,
            grid=grid,
            in_specs=[pl.BlockSpec((tm, _COLS), lambda i, seed_ref: (i, 0))],
            out_specs=pl.BlockSpec((tm, _COLS), lambda i, seed_ref: (i, 0)),
        ),
        compiler_params=pltpu.CompilerParams(
            dimension_semantics=("parallel",),
            vmem_limit_bytes=32 * 1024 * 1024,
        ),
        cost_estimate=cost,
        # Alias the tensor input to the output when in-place semantics are OK
        # (mirrors nn.Dropout's `inplace`): avoids a second full-size HBM buffer.
        input_output_aliases={1: 0} if inplace else {},
    )(seed_arr, x2)

    return out2.reshape(-1)[:total].reshape(orig_shape)


class DropoutEvalOverrider:
    """JAX/Pallas equivalent of the PyTorch DropoutEvalOverrider module."""

    def __init__(self, p=0.5, inplace=False):
        # Mirrors wrapping an nn.Dropout(p, inplace); `inplace` maps to
        # input_output_aliases in the pallas_call.
        self.p = float(p)
        self.inplace = bool(inplace)

    def __call__(self, x, seed=0):
        # Dropout is forced into "training" mode regardless of eval/train state.
        # TODO(synk): PyTorch draws from a global RNG each call; here the caller
        # supplies an explicit integer seed for fresh masks.
        return dropout_always_on(x, seed, self.p, inplace=self.inplace)


if __name__ == "__main__":
    key = jax.random.PRNGKey(0)
    # NCHW input, small shapes: batch=2, channels=4, spatial=16x16.
    x = jax.random.normal(key, (2, 4, 16, 16), dtype=jnp.float32)

    module = DropoutEvalOverrider(p=0.3, inplace=False)
    out = module(x, seed=42)
    out = jax.block_until_ready(out)

    # Sanity: every output is either 0 or x / (1 - p).
    scale = 1.0 / (1.0 - module.p)
    scaled = x * scale
    is_zero = jnp.isclose(out, 0.0)
    is_scaled = jnp.isclose(out, scaled, rtol=1e-5, atol=1e-5)
    assert bool(jnp.all(is_zero | is_scaled)), "dropout output mismatch"
    drop_frac = float(jnp.mean(is_zero & ~jnp.isclose(x, 0.0)))
    assert 0.05 < drop_frac < 0.7, f"implausible drop fraction {drop_frac}"

    print("KERNEL_OK")
</pallas_src>

<mosaic_0001>
module attributes {stable_mosaic.version = 11 : i64} {
  func.func @_dropout_kernel(%arg0: i32, %arg1: memref<1xi32, #tpu.memory_space<smem>>, %arg2: memref<8x512xf32, #tpu.memory_space<vmem>>, %arg3: memref<8x512xf32, #tpu.memory_space<vmem>>) attributes {dimension_semantics = [#tpu.dimension_semantics<parallel>], iteration_bounds = array<i64: 1>, scalar_prefetch = 1 : i64, scratch_operands = 0 : i64, tpu.core_type = #tpu.core_type<tc>, window_params = [{transform_indices = @transform_0, window_bounds = array<i64: 8, 512>}, {transform_indices = @transform_1, window_bounds = array<i64: 8, 512>}]} {
    %c8_i32 = arith.constant 8 : i32
    %0 = arith.muli %arg0, %c8_i32 : i32
    %1 = tpu.iota {dimensions = array<i32: 0>} : vector<8x512xi32>
    %2 = vector.broadcast %0 : i32 to vector<8x512xi32>
    %3 = arith.addi %1, %2 : vector<8x512xi32>
    %4 = tpu.iota {dimensions = array<i32: 1>} : vector<8x512xi32>
    %c9_i32 = arith.constant 9 : i32
    %5 = vector.broadcast %c9_i32 : i32 to vector<8x512xi32>
    %6 = arith.shli %3, %5 : vector<8x512xi32>
    %7 = arith.ori %6, %4 : vector<8x512xi32>
    %c0 = arith.constant 0 : index
    %8 = memref.load %arg1[%c0] : memref<1xi32, #tpu.memory_space<smem>>
    %c-1640531527_i32 = arith.constant -1640531527 : i32
    %9 = arith.muli %8, %c-1640531527_i32 : i32
    %10 = vector.broadcast %9 : i32 to vector<8x512xi32>
    %11 = arith.xori %7, %10 : vector<8x512xi32>
    %c16_i32 = arith.constant 16 : i32
    %12 = vector.broadcast %c16_i32 : i32 to vector<8x512xi32>
    %13 = arith.shrui %11, %12 : vector<8x512xi32>
    %14 = arith.xori %11, %13 : vector<8x512xi32>
    %c2146121005_i32 = arith.constant 2146121005 : i32
    %15 = vector.broadcast %c2146121005_i32 : i32 to vector<8x512xi32>
    %16 = arith.muli %14, %15 : vector<8x512xi32>
    %c15_i32 = arith.constant 15 : i32
    %17 = vector.broadcast %c15_i32 : i32 to vector<8x512xi32>
    %18 = arith.shrui %16, %17 : vector<8x512xi32>
    %19 = arith.xori %16, %18 : vector<8x512xi32>
    %c-2073254261_i32 = arith.constant -2073254261 : i32
    %20 = vector.broadcast %c-2073254261_i32 : i32 to vector<8x512xi32>
    %21 = arith.muli %19, %20 : vector<8x512xi32>
    %c16_i32_0 = arith.constant 16 : i32
    %22 = vector.broadcast %c16_i32_0 : i32 to vector<8x512xi32>
    %23 = arith.shrui %21, %22 : vector<8x512xi32>
    %24 = arith.xori %21, %23 : vector<8x512xi32>
    %c1288490189_i32 = arith.constant 1288490189 : i32
    %25 = vector.broadcast %c1288490189_i32 : i32 to vector<8x512xi32>
    %26 = arith.cmpi uge, %24, %25 : vector<8x512xi32>
    %c0_1 = arith.constant 0 : index
    %c0_2 = arith.constant 0 : index
    %27 = vector.load %arg2[%c0_1, %c0_2] : memref<8x512xf32, #tpu.memory_space<vmem>>, vector<8x512xf32>
    %cst = arith.constant 1.42857146 : f32
    %28 = vector.broadcast %cst : f32 to vector<8x512xf32>
    %29 = arith.mulf %27, %28 : vector<8x512xf32>
    %cst_3 = arith.constant 0.000000e+00 : f32
    %30 = vector.broadcast %cst_3 : f32 to vector<8x512xf32>
    %31 = arith.select %26, %29, %30 : vector<8x512xi1>, vector<8x512xf32>
    %c0_4 = arith.constant 0 : index
    %c0_5 = arith.constant 0 : index
    %32 = vector.load %arg3[%c0_4, %c0_5] : memref<8x512xf32, #tpu.memory_space<vmem>>, vector<8x512xf32>
    tpu.vector_store %arg3[%c0_4, %c0_5], %31 {strides = array<i32>} : memref<8x512xf32, #tpu.memory_space<vmem>>, vector<8x512xf32>,
    return
  }
  func.func @transform_0(%arg0: i32, %arg1: memref<1xi32, #tpu.memory_space<smem>>) -> (i32, i32) {
    %c0_i32 = arith.constant 0 : i32
    %c0_i32_0 = arith.constant 0 : i32
    return %arg0, %c0_i32 : i32, i32
  }
  func.func @transform_1(%arg0: i32, %arg1: memref<1xi32, #tpu.memory_space<smem>>) -> (i32, i32) {
    %c0_i32 = arith.constant 0 : i32
    %c0_i32_0 = arith.constant 0 : i32
    return %arg0, %c0_i32 : i32, i32
  }
}

</mosaic_0001>

<llo_original>
// kernel: tpu_custom_call.1
$region0: #{tpu_custom_call.1}
  #allocation0 [shape = 'u32[]', space=smem, size = 0x4, offset = 0x4, fixed_abs, tag = 'smem constant byte address 0x4 - core index']
  #allocation1 [shape = 'u32[72,128]{1,0:T(1,128)}', space=vmem, size = 0x9000, scoped, tag = 'internal scratch']
  #allocation2 [shape = 's32[1]{0}', space=sflag, size = 0x4, scoped, tag = 'scoped memory for tpu_custom_call.1']
  #allocation3 [shape = 's32[1]{0:T(128)S(6)}', space=smem, size = 0x200, scoped, tag = 'prefetched SMEM operand 0']
  %s0 = inlined_call_operand.<no memory space> [shape: s32[1], index: 0, kind: input, shape index: {}]
  %s1 = inlined_call_operand.hbm [shape: f32[8,512], index: 1, kind: input, shape index: {}]
  %s2 = inlined_call_operand.hbm [shape: f32[8,512], index: 2, kind: output, shape index: {}]
  %s3 = sld [smem:[#allocation0]]
  $region18: #{tpu_custom_call.1} parent=0
    _
  %s5 = ssub.s32 1, %s3
  %s6 = scalar_select 0, %s5, %s3
  %7 = sst [smem:[#allocation3]] %s0
  $region1: #{tpu_custom_call.1} parent=0
    #allocation4 [shape = 'u8[16384]{0}', space=vmem, size = 0x4000, scoped, tag = 'input window, operand 1, single buffered']
    #allocation5 [shape = 's32[1]{0}', space=sflag, size = 0x4, scoped, tag = 'scoped memory for tpu_custom_call.1']
    #allocation6 [shape = 's32[1]{0}', space=sflag, size = 0x4, scoped, tag = 'scoped memory for tpu_custom_call.1']
    #allocation7 [shape = 'u8[16384]{0}', space=vmem, size = 0x4000, scoped, tag = 'output window, operand 0, single buffered']
    %8 = vsyncpa [#allocation5], 0
    %9 = vsyncpa [#allocation6], 0
    // Predicated region
    $region2: #{tpu_custom_call.1} parent=1 // pred_check
      _
    $region3: #{tpu_custom_call.1} parent=1 // pred_check_branch
      %11 = sbr.rel (0) target = $region5
    $region4: #{tpu_custom_call.1} parent=1 // pred_region
      %13 = vsyncadd [#allocation5], 0
      %s15 = sshll.u32 %s1, 4
      %s16 = int_to_ptr.hbm [resolvable:$true] %s15
      %s17 = sshll.u32 [#allocation4], 4
      %s18 = int_to_ptr.vmem [resolvable:$true] %s17
      %20 = dma.hbm_to_vmem [thread:$0]  %s16, 512, %s18, [#allocation5]
    $region5: #{tpu_custom_call.1} parent=1 // pred_fallthru
      _
    // Predicated region
    $region6: #{tpu_custom_call.1} parent=1 // pred_check
      _
    $region7: #{tpu_custom_call.1} parent=1 // pred_check_branch
      %22 = sbr.rel (0) target = $region9
    $region8: #{tpu_custom_call.1} parent=1 // pred_region
      %24 = dma.done [#allocation5], 512
    $region9: #{tpu_custom_call.1} parent=1 // pred_fallthru
      _
    %s25 = smul.u32 0, 8
    %v26 = vlaneseq
    %v27 = vshrl.u32 %v26, 7
    %v28 = vstv %s25
    %v29 = vadd.s32 %v27, %v28
    %v30 = vlaneseq
    %v31 = vand.u32 %v30, 127
    %v32 = vadd.s32 %v31, 128
    %v33 = vadd.s32 %v31, 256
    %v34 = vadd.s32 %v31, 384
    %v35 = vshll.u32 %v29, 9
    %v36 = vor.u32 %v35, %v31
    %v37 = vor.u32 %v35, %v32
    %v38 = vor.u32 %v35, %v33
    %v39 = vor.u32 %v35, %v34
    %s40 = sld [smem:[#allocation3]]
    %s41 = smul.u32 %s40, 2654435769
    %v42 = vstv %s41
    %v43 = vxor.u32 %v36, %v42
    %v44 = vxor.u32 %v37, %v42
    %v45 = vxor.u32 %v38, %v42
    %v46 = vxor.u32 %v39, %v42
    %v47 = vshrl.u32 %v43, 16
    %v48 = vshrl.u32 %v44, 16
    %v49 = vshrl.u32 %v45, 16
    %v50 = vshrl.u32 %v46, 16
    %v51 = vxor.u32 %v43, %v47
    %v52 = vxor.u32 %v44, %v48
    %v53 = vxor.u32 %v45, %v49
    %v54 = vxor.u32 %v46, %v50
    %v55 = vmul.u32 %v51, 2146121005
    %v56 = vmul.u32 %v52, 2146121005
    %v57 = vmul.u32 %v53, 2146121005
    %v58 = vmul.u32 %v54, 2146121005
    %v59 = vshrl.u32 %v55, 15
    %v60 = vshrl.u32 %v56, 15
    %v61 = vshrl.u32 %v57, 15
    %v62 = vshrl.u32 %v58, 15
    %v63 = vxor.u32 %v55, %v59
    %v64 = vxor.u32 %v56, %v60
    %v65 = vxor.u32 %v57, %v61
    %v66 = vxor.u32 %v58, %v62
    %v67 = vmul.u32 %v63, 2221713035
    %v68 = vmul.u32 %v64, 2221713035
    %v69 = vmul.u32 %v65, 2221713035
    %v70 = vmul.u32 %v66, 2221713035
    %v71 = vshrl.u32 %v67, 16
    %v72 = vshrl.u32 %v68, 16
    %v73 = vshrl.u32 %v69, 16
    %v74 = vshrl.u32 %v70, 16
    %v75 = vxor.u32 %v67, %v71
    %v76 = vxor.u32 %v68, %v72
    %v77 = vxor.u32 %v69, %v73
    %v78 = vxor.u32 %v70, %v74
    %v79 = vadd.s32 %v75, 2147483648
    %vm81 = vcmp.ge.s32.totalorder %v79, 3435973837
    %v82 = vadd.s32 %v76, 2147483648
    %vm84 = vcmp.ge.s32.totalorder %v82, 3435973837
    %v85 = vadd.s32 %v77, 2147483648
    %vm87 = vcmp.ge.s32.totalorder %v85, 3435973837
    %v88 = vadd.s32 %v78, 2147483648
    %vm90 = vcmp.ge.s32.totalorder %v88, 3435973837
    %v91 = vld [vmem:[#allocation4] sm:$0xff]
    %v92 = vld [vmem:[#allocation4 + $0x8] sm:$0xff]
    %v93 = vld [vmem:[#allocation4 + $0x10] sm:$0xff]
    %v94 = vld [vmem:[#allocation4 + $0x18] sm:$0xff]
    %v95 = vmul.f32 %v91, 1.4285715
    %v96 = vmul.f32 %v92, 1.4285715
    %v97 = vmul.f32 %v93, 1.4285715
    %v98 = vmul.f32 %v94, 1.4285715
    %v99 = vsel %vm81, %v95, 0.0
    %v100 = vsel %vm84, %v96, 0.0
    %v101 = vsel %vm87, %v97, 0.0
    %v102 = vsel %vm90, %v98, 0.0
    %103 = vst [vmem:[#allocation7] sm:$0xff] %v99
    %104 = vst [vmem:[#allocation7 + $0x8] sm:$0xff] %v100
    %105 = vst [vmem:[#allocation7 + $0x10] sm:$0xff] %v101
    %106 = vst [vmem:[#allocation7 + $0x18] sm:$0xff] %v102
    // Predicated region
    $region10: #{tpu_custom_call.1} parent=1 // pred_check
      _
    $region11: #{tpu_custom_call.1} parent=1 // pred_check_branch
      %108 = sbr.rel (0) target = $region13
    $region12: #{tpu_custom_call.1} parent=1 // pred_region
      %110 = vsyncadd [#allocation6], 0
      %s112 = sshll.u32 [#allocation7], 4
      %s113 = int_to_ptr.vmem [resolvable:$true] %s112
      %s114 = sshll.u32 %s2, 4
      %s115 = int_to_ptr.hbm [resolvable:$true] %s114
      %117 = dma.vmem_to_hbm [thread:$0]  %s113, 512, %s115, [#allocation6]
    $region13: #{tpu_custom_call.1} parent=1 // pred_fallthru
      _
    // Predicated region
    $region14: #{tpu_custom_call.1} parent=1 // pred_check
      _
    $region15: #{tpu_custom_call.1} parent=1 // pred_check_branch
      %119 = sbr.rel (0) target = $region17
    $region16: #{tpu_custom_call.1} parent=1 // pred_region
      %121 = dma.done [#allocation6], 512
    $region17: #{tpu_custom_call.1} parent=1 // pred_fallthru
      _
    %122 = vsyncpa [#allocation5], 1
    %123 = vsyncpa [#allocation6], 1

</llo_original>
